<compile_context>
chip_gen: v7x
topology: tpu7x:2x2x1
jax: 0.10.0
libtpu: 0.0.40
codegen_flags: <defaults>
</compile_context>

<pallas_src>
import functools

import jax
import jax.numpy as jnp
from jax.experimental import pallas as pl
from jax.experimental.pallas import tpu as pltpu


def _logreg_kernel(x_ref, w_ref, s_ref, o_ref, *, d):
    """x_ref: (tile, k*d) VMEM, w_ref: (1, k*d) VMEM (weight tiled k times),
    s_ref: (3,) SMEM = [bias, 1-sigmoid(c), sigmoid(c)/2], o_ref: (tile, k) VMEM."""
    prod = x_ref[...] * w_ref[...]                       # VPU elementwise
    width = prod.shape[-1]
    k = width // d

    cols = []
    for g in range(k):                                   # static unrolled loop (k <= 16)
        grp = prod[:, g * d:(g + 1) * d]
        if d > 128 and d % 128 == 0:
            # Pre-accumulate 128-lane chunks on the VPU, then one lane reduce
            # per vreg row-group (keeps XLU work independent of d).
            acc = grp[:, 0:128]
            for c0 in range(128, d, 128):
                acc = acc + grp[:, c0:c0 + 128]
            grp = acc
        cols.append(jnp.sum(grp, axis=-1, keepdims=True))  # (tile, 1)

    row_dot = cols[0] if k == 1 else jnp.concatenate(cols, axis=-1)   # (tile, k)
    logits = row_dot + s_ref[0]                          # + bias
    y_pred = jax.nn.sigmoid(logits)                      # EUP
    # scaled_pred = (1 - sig_c) * y_pred + sig_c / 2, with both scalars precomputed.
    o_ref[...] = (s_ref[1] * y_pred + s_ref[2]).astype(o_ref.dtype)


def _vmem_capacity_bytes():
    try:
        return int(pltpu.get_tpu_info().vmem_capacity_bytes)
    except Exception:
        return 128 * 1024 * 1024  # conservative v5e/v6e default


def logistic_regression_forward(x, weight, bias, c, *, x_block_budget_bytes=None):
    """x: (B, D) f32, weight: (1, D) f32, bias: scalar, c: scalar -> (B, 1) f32."""
    x = jnp.asarray(x, jnp.float32)
    B, D = x.shape
    weight = jnp.asarray(weight, jnp.float32).reshape(1, D)

    # Hoist sigmoid(c) out of the kernel: [bias, 1 - sig_c, sig_c / 2] in SMEM.
    sig_c = jax.nn.sigmoid(jnp.asarray(c, jnp.float32).reshape(()))
    scalars = jnp.stack(
        [jnp.asarray(bias, jnp.float32).reshape(()), 1.0 - sig_c, 0.5 * sig_c]
    )  # (3,)

    # ---- Batch -> lane folding for small D (lane-dense loads/stores). ----
    k = 128 // D if (D < 128 and 128 % D == 0) else 1
    b_fold = B
    if k > 1 and B % k != 0:
        # Only a few tail rows; copy only happens when B is not a multiple of k.
        pad = k - B % k
        x = jnp.pad(x, ((0, pad), (0, 0)))
        b_fold = B + pad
    rows = b_fold // k
    width = k * D
    x = x.reshape(rows, width)                       # contiguous reshape
    w = jnp.tile(weight, (1, k)) if k > 1 else weight  # (1, width)

    # ---- Byte-budgeted tile sizing (generation-aware). ----
    vmem_cap = _vmem_capacity_bytes()
    if x_block_budget_bytes is None:
        # ~10 MiB per x block on 128-MiB-VMEM parts (v5e/v6e), ~5 MiB on v7x (64 MiB),
        # remembering that BlockSpec double-buffers each block.
        x_block_budget_bytes = (10 << 20) if vmem_cap > (64 << 20) else (5 << 20)
    padded_width = pl.cdiv(width, 128) * 128         # VMEM pads the lane dim to 128
    tile = x_block_budget_bytes // (4 * padded_width)
    tile = max(128, (tile // 128) * 128)             # multiple of 128 rows

    kernel = functools.partial(_logreg_kernel, d=D)

    if rows <= tile:
        # Single block: no grid, no pipeline scaffolding.
        out = pl.pallas_call(
            kernel,
            out_shape=jax.ShapeDtypeStruct((rows, k), jnp.float32),
            in_specs=[
                pl.BlockSpec(memory_space=pltpu.MemorySpace.VMEM),   # x (whole array)
                pl.BlockSpec(memory_space=pltpu.MemorySpace.VMEM),   # weight
                pl.BlockSpec(memory_space=pltpu.MemorySpace.SMEM),   # scalars
            ],
            out_specs=pl.BlockSpec(memory_space=pltpu.MemorySpace.VMEM),
        )(x, w, scalars)
    else:
        # Multi-tile grid; ragged final block is clipped by Pallas (no pad copy).
        num_tiles = pl.cdiv(rows, tile)
        x_blk = tile * padded_width * 4
        o_blk = tile * 128 * 4                       # out lane dim pads to 128
        w_blk = 8 * padded_width * 4
        vmem_limit = 2 * x_blk + 2 * o_blk + 2 * w_blk + (2 << 20)
        vmem_limit = int(min(vmem_limit, int(0.8 * vmem_cap)))
        out = pl.pallas_call(
            kernel,
            out_shape=jax.ShapeDtypeStruct((rows, k), jnp.float32),
            grid=(num_tiles,),
            in_specs=[
                pl.BlockSpec((tile, width), lambda i: (i, 0)),        # x tile
                pl.BlockSpec((1, width), lambda i: (0, 0)),           # weight (resident)
                pl.BlockSpec(memory_space=pltpu.MemorySpace.SMEM),    # scalars
            ],
            out_specs=pl.BlockSpec((tile, k), lambda i: (i, 0)),
            compiler_params=pltpu.CompilerParams(
                dimension_semantics=("parallel",),   # v7x megacore shards the batch axis
                vmem_limit_bytes=vmem_limit,
            ),
        )(x, w, scalars)

    # Unfold (rows, k) -> (B, 1); row-major order matches the wrapper reshape.
    return out.reshape(b_fold, 1)[:B]


def reference_forward(x, weight, bias, c):
    logits = x @ jnp.asarray(weight, jnp.float32).reshape(-1, 1) + bias
    y_pred = jax.nn.sigmoid(logits)
    sig_c = jax.nn.sigmoid(jnp.asarray(c, jnp.float32))
    return (1.0 - sig_c) * y_pred + sig_c / 2.0


if __name__ == "__main__":
    key = jax.random.PRNGKey(0)
    k_x, k_b, k_w, k_x2 = jax.random.split(key, 4)

    B, D = 8, 32  # batch=8, input_size=32

    x = jax.random.normal(k_x, (B, D), dtype=jnp.float32)

    # Parameters matching the module's __init__: weight zeroed, bias default
    # init (uniform in [-1/sqrt(D), 1/sqrt(D)]), c = 0.0.
    weight0 = jnp.zeros((1, D), dtype=jnp.float32)
    bound = 1.0 / (D ** 0.5)
    bias = jax.random.uniform(k_b, (), jnp.float32, minval=-bound, maxval=bound)
    c = jnp.float32(0.0)

    out = jax.block_until_ready(logistic_regression_forward(x, weight0, bias, c))
    ref = reference_forward(x, weight0, bias, c)
    assert out.shape == (B, 1), out.shape
    assert jnp.allclose(out, ref, atol=1e-5, rtol=1e-5), (out, ref)

    # Non-zero weight and non-zero c (exercises the folded dot-product path).
    weight1 = jax.random.normal(k_w, (1, D), dtype=jnp.float32) * 0.1
    c1 = jnp.float32(0.3)
    out1 = jax.block_until_ready(logistic_regression_forward(x, weight1, bias, c1))
    ref1 = reference_forward(x, weight1, bias, c1)
    assert jnp.allclose(out1, ref1, atol=1e-5, rtol=1e-5), (out1, ref1)

    # Multi-tile path with a ragged final block (small artificial budget forces
    # tile=128 folded rows; 1400 rows -> 350 folded rows -> 3 blocks, last partial).
    B2 = 1400
    x2 = jax.random.normal(k_x2, (B2, D), dtype=jnp.float32)
    out2 = jax.block_until_ready(
        logistic_regression_forward(x2, weight1, bias, c1,
                                    x_block_budget_bytes=64 * 1024)
    )
    ref2 = reference_forward(x2, weight1, bias, c1)
    assert out2.shape == (B2, 1), out2.shape
    assert jnp.allclose(out2, ref2, atol=1e-5, rtol=1e-5), (out2, ref2)

    print("KERNEL_OK")
</pallas_src>

<mosaic_0001>
module attributes {stable_mosaic.version = 11 : i64} {
  func.func @_logreg_kernel(%arg0: memref<2x128xf32, #tpu.memory_space<vmem>>, %arg1: memref<1x128xf32, #tpu.memory_space<vmem>>, %arg2: memref<3xf32, #tpu.memory_space<smem>>, %arg3: memref<2x4xf32, #tpu.memory_space<vmem>>) attributes {dimension_semantics = [], scalar_prefetch = 0 : i64, scratch_operands = 0 : i64, tpu.core_type = #tpu.core_type<tc>} {
    %c0 = arith.constant 0 : index
    %c0_0 = arith.constant 0 : index
    %0 = vector.load %arg0[%c0, %c0_0] : memref<2x128xf32, #tpu.memory_space<vmem>>, vector<2x128xf32>
    %c0_1 = arith.constant 0 : index
    %c0_2 = arith.constant 0 : index
    %1 = vector.load %arg1[%c0_1, %c0_2] : memref<1x128xf32, #tpu.memory_space<vmem>>, vector<1x128xf32>
    %2 = vector.broadcast %1 : vector<1x128xf32> to vector<2x128xf32>
    %3 = arith.mulf %0, %2 : vector<2x128xf32>
    %4 = vector.extract_strided_slice %3 {offsets = [0, 0], sizes = [2, 32], strides = [1, 1]} : vector<2x128xf32> to vector<2x32xf32>
    %cst = arith.constant dense<0.000000e+00> : vector<2xf32>
    %5 = vector.multi_reduction <add>, %4, %cst [1] : vector<2x32xf32> to vector<2xf32>
    %6 = vector.shape_cast %5 : vector<2xf32> to vector<2x1xf32>
    %7 = vector.extract_strided_slice %3 {offsets = [0, 32], sizes = [2, 32], strides = [1, 1]} : vector<2x128xf32> to vector<2x32xf32>
    %cst_3 = arith.constant dense<0.000000e+00> : vector<2xf32>
    %8 = vector.multi_reduction <add>, %7, %cst_3 [1] : vector<2x32xf32> to vector<2xf32>
    %9 = vector.shape_cast %8 : vector<2xf32> to vector<2x1xf32>
    %10 = vector.extract_strided_slice %3 {offsets = [0, 64], sizes = [2, 32], strides = [1, 1]} : vector<2x128xf32> to vector<2x32xf32>
    %cst_4 = arith.constant dense<0.000000e+00> : vector<2xf32>
    %11 = vector.multi_reduction <add>, %10, %cst_4 [1] : vector<2x32xf32> to vector<2xf32>
    %12 = vector.shape_cast %11 : vector<2xf32> to vector<2x1xf32>
    %13 = vector.extract_strided_slice %3 {offsets = [0, 96], sizes = [2, 32], strides = [1, 1]} : vector<2x128xf32> to vector<2x32xf32>
    %cst_5 = arith.constant dense<0.000000e+00> : vector<2xf32>
    %14 = vector.multi_reduction <add>, %13, %cst_5 [1] : vector<2x32xf32> to vector<2xf32>
    %15 = vector.shape_cast %14 : vector<2xf32> to vector<2x1xf32>
    %16 = tpu.concatenate %6, %9, %12, %15 in 1 : vector<2x1xf32>, vector<2x1xf32>, vector<2x1xf32>, vector<2x1xf32> -> vector<2x4xf32>
    %c0_6 = arith.constant 0 : index
    %17 = memref.load %arg2[%c0_6] : memref<3xf32, #tpu.memory_space<smem>>
    %18 = vector.broadcast %17 : f32 to vector<2x4xf32>
    %19 = arith.addf %16, %18 : vector<2x4xf32>
    %20 = arith.negf %19 : vector<2x4xf32>
    %21 = math.exp %20 : vector<2x4xf32>
    %cst_7 = arith.constant 1.000000e+00 : f32
    %22 = vector.broadcast %cst_7 : f32 to vector<2x4xf32>
    %23 = arith.addf %22, %21 : vector<2x4xf32>
    %24 = arith.divf %22, %23 : vector<2x4xf32>
    %c1 = arith.constant 1 : index
    %25 = memref.load %arg2[%c1] : memref<3xf32, #tpu.memory_space<smem>>
    %26 = vector.broadcast %25 : f32 to vector<2x4xf32>
    %27 = arith.mulf %26, %24 : vector<2x4xf32>
    %c2 = arith.constant 2 : index
    %28 = memref.load %arg2[%c2] : memref<3xf32, #tpu.memory_space<smem>>
    %29 = vector.broadcast %28 : f32 to vector<2x4xf32>
    %30 = arith.addf %27, %29 : vector<2x4xf32>
    %c0_8 = arith.constant 0 : index
    %c0_9 = arith.constant 0 : index
    %31 = vector.load %arg3[%c0_8, %c0_9] : memref<2x4xf32, #tpu.memory_space<vmem>>, vector<2x4xf32>
    tpu.vector_store %arg3[%c0_8, %c0_9], %30 {strides = array<i32>} : memref<2x4xf32, #tpu.memory_space<vmem>>, vector<2x4xf32>,
    return
  }
}

</mosaic_0001>

<llo_original>
// kernel: tpu_custom_call.1
$region0: #{tpu_custom_call.1}
  #allocation0 [shape = 'u32[]', space=smem, size = 0x4, offset = 0x4, fixed_abs, tag = 'smem constant byte address 0x4 - core index']
  #allocation1 [shape = 'u32[144,128]{1,0:T(1,128)}', space=vmem, size = 0x12000, scoped, tag = 'internal scratch']
  %s0 = inlined_call_operand.hbm [shape: f32[2,128], index: 0, kind: input, shape index: {}]
  %s1 = inlined_call_operand.vmem [shape: f32[1,128], index: 1, kind: input, shape index: {}]
  %s2 = inlined_call_operand.vmem [shape: f32[3], index: 2, kind: input, shape index: {}]
  %s3 = inlined_call_operand.hbm [shape: f32[2,4], index: 3, kind: output, shape index: {}]
  %s4 = sld [smem:[#allocation0]]
  $region30: #{tpu_custom_call.1} parent=0
    _
  %s6 = ssub.s32 1, %s4
  %s7 = scalar_select 0, %s6, %s4
  $region1: #{tpu_custom_call.1} parent=0
    #allocation2 [shape = 'u8[1024]{0}', space=vmem, size = 0x400, scoped, tag = 'input window, operand 0, single buffered']
    #allocation3 [shape = 's32[1]{0}', space=sflag, size = 0x4, scoped, tag = 'scoped memory for tpu_custom_call.1']
    #allocation4 [shape = 's32[1]{0}', space=sflag, size = 0x4, scoped, tag = 'scoped memory for tpu_custom_call.1']
    #allocation5 [shape = 's32[1]{0}', space=sflag, size = 0x4, scoped, tag = 'scoped memory for tpu_custom_call.1']
    #allocation6 [shape = 'u8[512]{0}', space=smem, size = 0x200, scoped, tag = 'input window, operand 2, single buffered']
    #allocation7 [shape = 'u8[1024]{0}', space=vmem, size = 0x400, scoped, tag = 'output window, operand 0, single buffered']
    %8 = vsyncpa [#allocation3], 0
    %9 = vsyncpa [#allocation5], 0
    %10 = vsyncpa [#allocation4], 0
    // Predicated region
    $region2: #{tpu_custom_call.1} parent=1 // pred_check
      _
    $region3: #{tpu_custom_call.1} parent=1 // pred_check_branch
      %12 = sbr.rel (0) target = $region5
    $region4: #{tpu_custom_call.1} parent=1 // pred_region
      %s14 = ssub.s32 32, 32
      %15 = vsyncadd [#allocation3], %s14
      %s17 = sshll.u32 [#allocation2], 4
      %s18 = int_to_ptr.vmem [resolvable:$true] %s17
      %20 = dma.hbm_to_vmem [thread:$0]  %s0, 32, %s18, [#allocation3]
    $region5: #{tpu_custom_call.1} parent=1 // pred_fallthru
      _
    // Predicated region
    $region6: #{tpu_custom_call.1} parent=1 // pred_check
      _
    $region7: #{tpu_custom_call.1} parent=1 // pred_check_branch
      %22 = sbr.rel (0) target = $region9
    $region8: #{tpu_custom_call.1} parent=1 // pred_region
      _
    $region9: #{tpu_custom_call.1} parent=1 // pred_fallthru
      _
    // Predicated region
    $region10: #{tpu_custom_call.1} parent=1 // pred_check
      _
    $region11: #{tpu_custom_call.1} parent=1 // pred_check_branch
      %24 = sbr.rel (0) target = $region13
    $region12: #{tpu_custom_call.1} parent=1 // pred_region
      %s26 = ssub.s32 16, 16
      %27 = vsyncadd [#allocation5], %s26
      %s29 = sshll.u32 %s2, 4
      %s30 = int_to_ptr.vmem [resolvable:$true] %s29
      %32 = dma.vmem_to_smem %s30, 16, [#allocation6], [#allocation5]
    $region13: #{tpu_custom_call.1} parent=1 // pred_fallthru
      _
    // Predicated region
    $region14: #{tpu_custom_call.1} parent=1 // pred_check
      _
    $region15: #{tpu_custom_call.1} parent=1 // pred_check_branch
      %34 = sbr.rel (0) target = $region17
    $region16: #{tpu_custom_call.1} parent=1 // pred_region
      %35 = dma.done [#allocation3], 32
    $region17: #{tpu_custom_call.1} parent=1 // pred_fallthru
      _
    // Predicated region
    $region18: #{tpu_custom_call.1} parent=1 // pred_check
      _
    $region19: #{tpu_custom_call.1} parent=1 // pred_check_branch
      %37 = sbr.rel (0) target = $region21
    $region20: #{tpu_custom_call.1} parent=1 // pred_region
      %38 = dma.done [#allocation5], 16
    $region21: #{tpu_custom_call.1} parent=1 // pred_fallthru
      _
    %39 = sfence
    %v40 = vld [vmem:[#allocation2] sm:$0x3]
    %v41 = vld [vmem:[%s1] sm:$0x1]
    %v43 = vlaneseq
    %v44 = vshrl.u32 %v43, 7
    %v45 = vsub.s32 0, %v44
    %v46 = vrot.slane %v41, %v45
    %v48 = vmul.f32 %v40, %v46
    %vm49 = vcmask 254976
    %v50 = vsel %vm49, %v48, 0.0
    %51 = vadd.xlane.f32.xlu0 %v50
    %v52 = vpop.xlane.xlu0 %51
    %54 = vrot.lane.b32.xlu0 %v48, 96
    %v55 = vpop.permute.xlu0 %54
    %v57 = vsel %vm49, %v55, 0.0
    %58 = vadd.xlane.f32.xlu0 %v57
    %v59 = vpop.xlane.xlu0 %58
    %60 = vrot.lane.b32.xlu0 %v48, 64
    %v61 = vpop.permute.xlu0 %60
    %v63 = vsel %vm49, %v61, 0.0
    %64 = vadd.xlane.f32.xlu0 %v63
    %v65 = vpop.xlane.xlu0 %64
    %66 = vrot.lane.b32.xlu0 %v48, 32
    %v67 = vpop.permute.xlu0 %66
    %v69 = vsel %vm49, %v67, 0.0
    %70 = vadd.xlane.f32.xlu0 %v69
    %v71 = vpop.xlane.xlu0 %70
    %vm72 = vcmask 7168
    %v73 = vsel %vm72, %v52, %v59
    %vm74 = vcmask 15360
    %v75 = vsel %vm74, %v73, %v65
    %vm76 = vcmask 23552
    %v77 = vsel %vm76, %v75, %v71
    %s78 = sld [smem:[#allocation6]]
    %v79 = vstv %s78
    %v80 = vadd.f32 %v77, %v79
    %v81 = vxor.u32 %v80, 2147483648
    %v82 = vmul.f32 %v81, 1.442695
    %v83 = vpow.pop %v82
    %v84 = vadd.f32 %v83, 1.0
    %v85 = vrcp.pop %v84
    %v86 = vmul.f32 1.0, %v85
    %s87 = sld [smem:[#allocation6 + $0x1]]
    %v88 = vstv %s87
    %v89 = vmul.f32 %v88, %v86
    %s90 = sld [smem:[#allocation6 + $0x2]]
    %v91 = vstv %s90
    %v92 = vadd.f32 %v89, %v91
    %vm93 = vcmask 25600
    %94 = vst.msk [vmem:[#allocation7] sm:$0x3] %vm93, %v92
    // Predicated region
    $region22: #{tpu_custom_call.1} parent=1 // pred_check
      _
    $region23: #{tpu_custom_call.1} parent=1 // pred_check_branch
      %96 = sbr.rel (0) target = $region25
    $region24: #{tpu_custom_call.1} parent=1 // pred_region
      %s98 = ssub.s32 32, 32
      %99 = vsyncadd [#allocation4], %s98
      %s101 = sshll.u32 [#allocation7], 4
      %s102 = int_to_ptr.vmem [resolvable:$true] %s101
      %104 = dma.vmem_to_hbm [thread:$0]  %s102, 32, %s3, [#allocation4]
    $region25: #{tpu_custom_call.1} parent=1 // pred_fallthru
      _
    // Predicated region
    $region26: #{tpu_custom_call.1} parent=1 // pred_check
      _
    $region27: #{tpu_custom_call.1} parent=1 // pred_check_branch
      %106 = sbr.rel (0) target = $region29
    $region28: #{tpu_custom_call.1} parent=1 // pred_region
      %107 = dma.done [#allocation4], 32
    $region29: #{tpu_custom_call.1} parent=1 // pred_fallthru
      _
    %108 = vsyncpa [#allocation3], 1
    %109 = vsyncpa [#allocation4], 1
    %110 = vsyncpa [#allocation5], 1

</llo_original>
